<compile_context>
chip_gen: v7x
topology: tpu7x:2x2x1
jax: 0.10.0
libtpu: 0.0.40
codegen_flags: <defaults>
</compile_context>

<pallas_src>
import jax
import jax.numpy as jnp
from jax.experimental import pallas as pl
from jax.experimental.pallas import tpu as pltpu

NUM_JOINTS = 21
NUM_VERTS = 778
NUM_VERTS_SUB = 195
NUM_TOKENS = NUM_JOINTS + NUM_VERTS_SUB      # 216
FEAT_DIM = 2048
CAM_HIDDEN = 150
CENTER_IDX = 9                               # MANO center joint index

# Packed small-parameter buffer layout: (8, 1024) float32
#   rows 0:3, lanes   0:216  -> S        = trans_ref_wt @ ref_t            (3,216)
#   rows 0:3, lanes 256:406  -> cam_fc3 weight, (out,in) layout            (3,150)
#   rows 0:3, lanes 512:707  -> S_sub    = S[:, 21:]                       (3,195)
#   row  3,   lanes   0:3    -> b_fold   (backbone_b@W_img^T + trans_b)    (3,)
#   row  3,   lanes 128:131  -> cam_fc weight                              (3,)
#   row  4,   lanes   0:216  -> cS       = cam_fc_w@S + cam_fc_b           (216,)
#   row  5,   lanes   0:3    -> cam_fc3 bias                               (3,)
#   row  6,   lanes   0:150  -> cam_fc2 bias                               (150,)
#   row  7,   lanes   0:778  -> upsampling bias                            (778,)


# ------------------------------ fused kernel -------------------------------

def _metro_fused_kernel(img_ref, wfold_ref, pkd_ref, cam2w_ref, upw_ref,
                        fc_out, v_out):
    f32 = jnp.float32
    bf16 = jnp.bfloat16
    BB = img_ref.shape[0]                                       # batch per grid step

    # ---- image feature: global average pool folded through backbone + trans
    #      image-part (linear stand-ins folded into one (C,3) matrix) --------
    pooled = jnp.mean(img_ref[...], axis=2)                     # (BB, C)
    img_row = jnp.dot(pooled, wfold_ref[...],
                      preferred_element_type=f32)               # (BB, 3)
    img_row = img_row + pkd_ref[3:4, 0:3]                       # + folded bias

    # ---- camera head -------------------------------------------------------
    # cam_fc(features) = cS[t] + cam_fc_w . img_row[b]   (token axis on lanes)
    cam_w = pkd_ref[3:4, 128:131]                               # (1, 3)
    cam_scalar = jax.lax.dot_general(
        img_row, cam_w, dimension_numbers=(((1,), (1,)), ((), ())),
        preferred_element_type=f32)                             # (BB, 1)
    cam_tok = pkd_ref[4:5, 0:NUM_TOKENS] + cam_scalar           # (BB, 216)
    cam_h = jnp.dot(cam_tok.astype(bf16), cam2w_ref[...],
                    preferred_element_type=f32)                 # (BB, 150)
    cam_h = cam_h + pkd_ref[6:7, 0:CAM_HIDDEN]
    cam = jax.lax.dot_general(
        cam_h, pkd_ref[0:3, 256:256 + CAM_HIDDEN],
        dimension_numbers=(((1,), (1,)), ((), ())),
        preferred_element_type=f32) + pkd_ref[5:6, 0:3]         # (BB, 3)
    cam_full = jnp.concatenate(
        [cam, jnp.zeros((BB, NUM_TOKENS - 3), f32)], axis=1)    # (BB, 216)

    # ---- token features: batch-invariant S rows + per-batch image column ---
    c0 = img_row[:, 0:1]                                        # (BB, 1)
    c1 = img_row[:, 1:2]
    c2 = img_row[:, 2:3]
    feat0 = pkd_ref[0:1, 0:NUM_TOKENS] + c0                     # (BB, 216)
    feat1 = pkd_ref[1:2, 0:NUM_TOKENS] + c1
    feat2 = pkd_ref[2:3, 0:NUM_TOKENS] + c2
    # merged output: 3 feature rows (coord-major, batch stacked) + camera row
    fc_out[0] = jnp.concatenate([feat0, feat1, feat2, cam_full],
                                axis=0).astype(fc_out.dtype)    # (4*BB, 216)

    # ---- vertex upsampling: one matmul with M = 3*BB ------------------------
    sub0 = pkd_ref[0:1, 512:512 + NUM_VERTS_SUB] + c0           # (BB, 195)
    sub1 = pkd_ref[1:2, 512:512 + NUM_VERTS_SUB] + c1
    sub2 = pkd_ref[2:3, 512:512 + NUM_VERTS_SUB] + c2
    sub = jnp.concatenate([sub0, sub1, sub2], axis=0)           # (3*BB, 195)
    verts = jnp.dot(sub.astype(bf16), upw_ref[...],
                    preferred_element_type=f32)                 # (3*BB, 778)
    verts = verts + pkd_ref[7:8, 0:NUM_VERTS]
    v_out[0] = verts.astype(v_out.dtype)


# ------------------------------ fused wrapper ------------------------------

def metro_fused_heads(images_2d, ref_t, params, batch_block=None):
    """Single fused pallas_call.

    batch_block: batch elements per grid step.  Default (None) folds the whole
    batch into ONE grid step (best on single-TensorCore v5e/v6e).  On v7x with
    B >= 2 pass batch_block = B // 2 so megacore sharding feeds both cores.
    """
    B, C, HW = images_2d.shape
    BB = B if batch_block is None else batch_block
    if B % BB != 0:
        raise ValueError("batch_block must divide the batch size")
    G = B // BB
    N = NUM_TOKENS
    f32 = jnp.float32

    # --- algebraic folds of the purely-linear stand-ins (exact; must be undone
    #     if a real nonlinear backbone / BERT trans_encoder is substituted) ---
    w_fold = params["backbone_w"] @ params["trans_img_wt"].T            # (C, 3)
    b_fold = (params["backbone_b"] @ params["trans_img_wt"].T
              + params["trans_b"])                                      # (1, 3)
    S = params["trans_ref_wt"] @ ref_t[0]                               # (3, 216)
    cS = params["cam_fc_w"] @ S + params["cam_fc_b"]                    # (1, 216)

    # --- pack every sub-tile parameter into one (8, 1024) VMEM buffer -------
    pkd = jnp.zeros((8, 1024), f32)
    pkd = pkd.at[0:3, 0:N].set(S)
    pkd = pkd.at[0:3, 256:256 + CAM_HIDDEN].set(params["cam_fc3_wt"])
    pkd = pkd.at[0:3, 512:512 + NUM_VERTS_SUB].set(S[:, NUM_JOINTS:])
    pkd = pkd.at[3, 0:3].set(b_fold[0])
    pkd = pkd.at[3, 128:131].set(params["cam_fc_w"][0])
    pkd = pkd.at[4, 0:N].set(cS[0])
    pkd = pkd.at[5, 0:3].set(params["cam_fc3_b"][0])
    pkd = pkd.at[6, 0:CAM_HIDDEN].set(params["cam_fc2_b"][0])
    pkd = pkd.at[7, 0:NUM_VERTS].set(params["upsampling_b"][0])

    # large weights travel as bf16 (halves critical-path DMA); f32 accumulation
    cam2w = params["cam_fc2_w"].astype(jnp.bfloat16)                    # (216, 150)
    upw = params["upsampling_w"].astype(jnp.bfloat16)                   # (195, 778)

    const = lambda shape: pl.BlockSpec(shape, lambda i: (0, 0))
    out_shape = (
        jax.ShapeDtypeStruct((G, 4 * BB, N), f32),            # feats (coord-major) + cam
        jax.ShapeDtypeStruct((G, 3 * BB, NUM_VERTS), f32),    # verts (coord-major)
    )
    fc, vv = pl.pallas_call(
        _metro_fused_kernel,
        out_shape=out_shape,
        grid=(G,),
        in_specs=(
            pl.BlockSpec((BB, C, HW), lambda i: (i, 0, 0)),   # image (lane-dense spatial)
            const((C, 3)),                                    # folded backbone+trans weight
            const((8, 1024)),                                 # packed small parameters
            const((N, CAM_HIDDEN)),                           # cam_param_fc2 weight (bf16)
            const((NUM_VERTS_SUB, NUM_VERTS)),                # upsampling weight (bf16)
        ),
        out_specs=(
            pl.BlockSpec((1, 4 * BB, N), lambda i: (i, 0, 0)),
            pl.BlockSpec((1, 3 * BB, NUM_VERTS), lambda i: (i, 0, 0)),
        ),
        compiler_params=pltpu.CompilerParams(
            dimension_semantics=("parallel",)),
    )(images_2d, w_fold, pkd, cam2w, upw)

    # --- unpack (tiny reshapes/transposes on KB-sized outputs) --------------
    fc = fc.reshape(G, 4, BB, N)
    features = fc[:, 0:3].transpose(0, 2, 3, 1).reshape(B, N, 3)        # (B, 216, 3)
    cam_param = fc[:, 3, :, 0:3].reshape(B, 3)                          # (B, 3)
    verts = vv.reshape(G, 3, BB, NUM_VERTS).transpose(0, 2, 3, 1)
    verts = verts.reshape(B, NUM_VERTS, 3)                              # (B, 778, 3)
    return features, cam_param, verts


# ------------------------------ forward pass -------------------------------

def metro_hand_forward(images, params, template_3d_joints, template_vertices,
                       template_vertices_sub):
    B, C, H, W = images.shape
    num_joints = template_3d_joints.shape[1]

    # --- template normalization (mesh_model output for zero pose / betas) ---
    root = template_3d_joints[:, CENTER_IDX, :]
    t_joints = template_3d_joints - root[:, None, :]
    t_verts_sub = template_vertices_sub - root[:, None, :]
    ref_vertices = jnp.concatenate([t_joints, t_verts_sub], axis=1)     # (1, 216, 3)
    ref_t = jnp.transpose(ref_vertices, (0, 2, 1))                      # (1, 3, 216)

    images_2d = images.reshape(B, C, H * W)        # lane-dense spatial axis for the pool
    features, cam_param, pred_vertices = metro_fused_heads(images_2d, ref_t, params)

    pred_3d_joints = features[:, :num_joints, :]                        # (B, 21, 3)
    pred_vertices_sub = features[:, num_joints:, :]                     # (B, 195, 3)
    # NOTE: torch does cam_param.squeeze() (drops batch dim when B==1); we keep
    # an explicit (B, 3) so the interface is batch-stable.
    return cam_param, pred_3d_joints, pred_vertices_sub, pred_vertices


# --------------------------------- driver ----------------------------------

def _dense_params(key, fan_in, fan_out):
    kw, kb = jax.random.split(key)
    w = jax.random.normal(kw, (fan_in, fan_out), jnp.float32) / jnp.sqrt(fan_in)
    b = jax.random.normal(kb, (1, fan_out), jnp.float32) * 0.01
    return w, b


if __name__ == "__main__":
    key = jax.random.PRNGKey(0)
    ks = jax.random.split(key, 10)

    B, C, H, W = 2, 4, 16, 16
    images = jax.random.normal(ks[0], (B, C, H, W), jnp.float32)

    params = {}
    # Module's own layers (shapes fixed by METRO_Hand_Network.__init__):
    params["upsampling_w"], params["upsampling_b"] = _dense_params(
        ks[1], NUM_VERTS_SUB, NUM_VERTS)                                 # Linear(195, 778)
    cam_w, cam_b = _dense_params(ks[2], 3, 1)                            # Linear(3, 1)
    params["cam_fc_w"], params["cam_fc_b"] = cam_w.T, cam_b              # stored (out,in)=(1,3)
    params["cam_fc2_w"], params["cam_fc2_b"] = _dense_params(
        ks[3], NUM_TOKENS, CAM_HIDDEN)                                   # Linear(216, 150)
    cam3_w, cam3_b = _dense_params(ks[4], CAM_HIDDEN, 3)                 # Linear(150, 3)
    params["cam_fc3_wt"], params["cam_fc3_b"] = cam3_w.T, cam3_b         # stored (out,in)=(3,150)

    # TODO(synk): backbone (ResNet/HRNet producing a 2048-d global feature) is an
    # external submodule; stand-in = global-average-pool + dense C -> 2048.
    params["backbone_w"], params["backbone_b"] = _dense_params(ks[5], C, FEAT_DIM)

    # TODO(synk): trans_encoder (multi-layer BERT stack) is an external submodule;
    # stand-in = dense 2051 -> 3, stored split into ref-part (3x3) and image-part
    # (3x2048) — mathematically identical to the concat + (2051,3) matmul.
    trans_w, trans_b = _dense_params(ks[6], 3 + FEAT_DIM, 3)
    params["trans_ref_wt"] = trans_w[:3, :].T                            # (3, 3)
    params["trans_img_wt"] = trans_w[3:, :].T                            # (3, 2048)
    params["trans_b"] = trans_b                                          # (1, 3)

    # TODO(synk): mesh_model / mesh_sampler are external; synthesize deterministic
    # MANO template joints/vertices for the zero-pose / zero-betas input.
    template_3d_joints = jax.random.normal(ks[7], (1, NUM_JOINTS, 3), jnp.float32) * 0.1
    template_vertices = jax.random.normal(ks[8], (1, NUM_VERTS, 3), jnp.float32) * 0.1
    template_vertices_sub = template_vertices[:, ::4, :][:, :NUM_VERTS_SUB, :]

    fwd = jax.jit(metro_hand_forward)
    outs = fwd(images, params, template_3d_joints, template_vertices,
               template_vertices_sub)
    cam_param, pred_3d_joints, pred_vertices_sub, pred_vertices = jax.block_until_ready(outs)

    assert cam_param.shape == (B, 3)
    assert pred_3d_joints.shape == (B, NUM_JOINTS, 3)
    assert pred_vertices_sub.shape == (B, NUM_VERTS_SUB, 3)
    assert pred_vertices.shape == (B, NUM_VERTS, 3)

    print("KERNEL_OK")
</pallas_src>

<mosaic_0001>
module attributes {stable_mosaic.version = 11 : i64} {
  func.func @_metro_fused_kernel(%arg0: i32, %arg1: memref<2x4x256xf32, #tpu.memory_space<vmem>>, %arg2: memref<4x3xf32, #tpu.memory_space<vmem>>, %arg3: memref<8x1024xf32, #tpu.memory_space<vmem>>, %arg4: memref<216x150xbf16, #tpu.memory_space<vmem>>, %arg5: memref<195x778xbf16, #tpu.memory_space<vmem>>, %arg6: memref<1x8x216xf32, #tpu.memory_space<vmem>>, %arg7: memref<1x6x778xf32, #tpu.memory_space<vmem>>) attributes {dimension_semantics = [#tpu.dimension_semantics<parallel>], iteration_bounds = array<i64: 1>, scalar_prefetch = 0 : i64, scratch_operands = 0 : i64, tpu.core_type = #tpu.core_type<tc>, window_params = [{transform_indices = @transform_0, window_bounds = array<i64: 2, 4, 256>}, {pipeline_mode = #tpu.pipeline_mode<synchronous>, transform_indices = @transform_1, window_bounds = array<i64: 4, 3>}, {pipeline_mode = #tpu.pipeline_mode<synchronous>, transform_indices = @transform_2, window_bounds = array<i64: 8, 1024>}, {pipeline_mode = #tpu.pipeline_mode<synchronous>, transform_indices = @transform_3, window_bounds = array<i64: 216, 150>}, {pipeline_mode = #tpu.pipeline_mode<synchronous>, transform_indices = @transform_4, window_bounds = array<i64: 195, 778>}, {transform_indices = @transform_5, window_bounds = array<i64: 1, 8, 216>}, {transform_indices = @transform_6, window_bounds = array<i64: 1, 6, 778>}]} {
    %c0 = arith.constant 0 : index
    %c0_0 = arith.constant 0 : index
    %c0_1 = arith.constant 0 : index
    %0 = vector.load %arg1[%c0, %c0_0, %c0_1] : memref<2x4x256xf32, #tpu.memory_space<vmem>>, vector<2x4x256xf32>
    %cst = arith.constant dense<0.000000e+00> : vector<2x4xf32>
    %1 = vector.multi_reduction <add>, %0, %cst [2] : vector<2x4x256xf32> to vector<2x4xf32>
    %cst_2 = arith.constant 2.560000e+02 : f32
    %2 = vector.broadcast %cst_2 : f32 to vector<2x4xf32>
    %3 = arith.divf %1, %2 : vector<2x4xf32>
    %c0_3 = arith.constant 0 : index
    %c0_4 = arith.constant 0 : index
    %4 = vector.load %arg2[%c0_3, %c0_4] : memref<4x3xf32, #tpu.memory_space<vmem>>, vector<4x3xf32>
    %cst_5 = arith.constant dense<0.000000e+00> : vector<2x3xf32>
    %5 = tpu.matmul %3, %4, %cst_5 {dimension_numbers = #tpu.dot_dimension_numbers<[1], [0], [0], [1], [0, 0, 1, 1], [], []>} : vector<2x4xf32>, vector<4x3xf32>, vector<2x3xf32> -> vector<2x3xf32>
    %c3 = arith.constant 3 : index
    %c0_6 = arith.constant 0 : index
    %6 = vector.load %arg3[%c3, %c0_6] : memref<8x1024xf32, #tpu.memory_space<vmem>>, vector<1x3xf32>
    %7 = vector.broadcast %6 : vector<1x3xf32> to vector<2x3xf32>
    %8 = arith.addf %5, %7 : vector<2x3xf32>
    %c3_7 = arith.constant 3 : index
    %c128 = arith.constant 128 : index
    %9 = vector.load %arg3[%c3_7, %c128] : memref<8x1024xf32, #tpu.memory_space<vmem>>, vector<1x3xf32>
    %cst_8 = arith.constant dense<0.000000e+00> : vector<2x1xf32>
    %10 = tpu.matmul %8, %9, %cst_8 {dimension_numbers = #tpu.dot_dimension_numbers<[1], [1], [0], [0], [0, 0, 1, 0], [], []>} : vector<2x3xf32>, vector<1x3xf32>, vector<2x1xf32> -> vector<2x1xf32>
    %c4 = arith.constant 4 : index
    %c0_9 = arith.constant 0 : index
    %11 = vector.load %arg3[%c4, %c0_9] : memref<8x1024xf32, #tpu.memory_space<vmem>>, vector<1x216xf32>
    %12 = vector.broadcast %11 : vector<1x216xf32> to vector<2x216xf32>
    %13 = vector.broadcast %10 : vector<2x1xf32> to vector<2x216xf32>
    %14 = arith.addf %12, %13 : vector<2x216xf32>
    %15 = arith.truncf %14 : vector<2x216xf32> to vector<2x216xbf16>
    %c0_10 = arith.constant 0 : index
    %c0_11 = arith.constant 0 : index
    %16 = vector.load %arg4[%c0_10, %c0_11] : memref<216x150xbf16, #tpu.memory_space<vmem>>, vector<216x150xbf16>
    %cst_12 = arith.constant dense<0.000000e+00> : vector<2x150xf32>
    %17 = tpu.matmul %15, %16, %cst_12 {dimension_numbers = #tpu.dot_dimension_numbers<[1], [0], [0], [1], [0, 0, 1, 1], [], []>} : vector<2x216xbf16>, vector<216x150xbf16>, vector<2x150xf32> -> vector<2x150xf32>
    %c6 = arith.constant 6 : index
    %c0_13 = arith.constant 0 : index
    %18 = vector.load %arg3[%c6, %c0_13] : memref<8x1024xf32, #tpu.memory_space<vmem>>, vector<1x150xf32>
    %19 = vector.broadcast %18 : vector<1x150xf32> to vector<2x150xf32>
    %20 = arith.addf %17, %19 : vector<2x150xf32>
    %c0_14 = arith.constant 0 : index
    %c256 = arith.constant 256 : index
    %21 = vector.load %arg3[%c0_14, %c256] : memref<8x1024xf32, #tpu.memory_space<vmem>>, vector<3x150xf32>
    %cst_15 = arith.constant dense<0.000000e+00> : vector<2x3xf32>
    %22 = tpu.matmul %20, %21, %cst_15 {dimension_numbers = #tpu.dot_dimension_numbers<[1], [1], [0], [0], [0, 0, 1, 0], [], []>} : vector<2x150xf32>, vector<3x150xf32>, vector<2x3xf32> -> vector<2x3xf32>
    %c5 = arith.constant 5 : index
    %c0_16 = arith.constant 0 : index
    %23 = vector.load %arg3[%c5, %c0_16] : memref<8x1024xf32, #tpu.memory_space<vmem>>, vector<1x3xf32>
    %24 = vector.broadcast %23 : vector<1x3xf32> to vector<2x3xf32>
    %25 = arith.addf %22, %24 : vector<2x3xf32>
    %cst_17 = arith.constant 0.000000e+00 : f32
    %26 = vector.broadcast %cst_17 : f32 to vector<2x213xf32>
    %27 = tpu.concatenate %25, %26 in 1 : vector<2x3xf32>, vector<2x213xf32> -> vector<2x216xf32>
    %28 = vector.extract_strided_slice %8 {offsets = [0, 0], sizes = [2, 1], strides = [1, 1]} : vector<2x3xf32> to vector<2x1xf32>
    %29 = vector.extract_strided_slice %8 {offsets = [0, 1], sizes = [2, 1], strides = [1, 1]} : vector<2x3xf32> to vector<2x1xf32>
    %30 = vector.extract_strided_slice %8 {offsets = [0, 2], sizes = [2, 1], strides = [1, 1]} : vector<2x3xf32> to vector<2x1xf32>
    %c0_18 = arith.constant 0 : index
    %c0_19 = arith.constant 0 : index
    %31 = vector.load %arg3[%c0_18, %c0_19] : memref<8x1024xf32, #tpu.memory_space<vmem>>, vector<1x216xf32>
    %32 = vector.broadcast %31 : vector<1x216xf32> to vector<2x216xf32>
    %33 = vector.broadcast %28 : vector<2x1xf32> to vector<2x216xf32>
    %34 = arith.addf %32, %33 : vector<2x216xf32>
    %c1 = arith.constant 1 : index
    %c0_20 = arith.constant 0 : index
    %35 = vector.load %arg3[%c1, %c0_20] : memref<8x1024xf32, #tpu.memory_space<vmem>>, vector<1x216xf32>
    %36 = vector.broadcast %35 : vector<1x216xf32> to vector<2x216xf32>
    %37 = vector.broadcast %29 : vector<2x1xf32> to vector<2x216xf32>
    %38 = arith.addf %36, %37 : vector<2x216xf32>
    %c2 = arith.constant 2 : index
    %c0_21 = arith.constant 0 : index
    %39 = vector.load %arg3[%c2, %c0_21] : memref<8x1024xf32, #tpu.memory_space<vmem>>, vector<1x216xf32>
    %40 = vector.broadcast %39 : vector<1x216xf32> to vector<2x216xf32>
    %41 = vector.broadcast %30 : vector<2x1xf32> to vector<2x216xf32>
    %42 = arith.addf %40, %41 : vector<2x216xf32>
    %43 = tpu.concatenate %34, %38, %42, %27 in 0 : vector<2x216xf32>, vector<2x216xf32>, vector<2x216xf32>, vector<2x216xf32> -> vector<8x216xf32>
    %c0_22 = arith.constant 0 : index
    %c0_23 = arith.constant 0 : index
    %c0_24 = arith.constant 0 : index
    %44 = vector.load %arg6[%c0_22, %c0_23, %c0_24] : memref<1x8x216xf32, #tpu.memory_space<vmem>>, vector<1x8x216xf32>
    %45 = vector.shape_cast %44 : vector<1x8x216xf32> to vector<8x216xf32>
    %46 = vector.shape_cast %43 : vector<8x216xf32> to vector<1x8x216xf32>
    tpu.vector_store %arg6[%c0_22, %c0_23, %c0_24], %46 {strides = array<i32>} : memref<1x8x216xf32, #tpu.memory_space<vmem>>, vector<1x8x216xf32>,
    %c0_25 = arith.constant 0 : index
    %c512 = arith.constant 512 : index
    %47 = vector.load %arg3[%c0_25, %c512] : memref<8x1024xf32, #tpu.memory_space<vmem>>, vector<1x195xf32>
    %48 = vector.broadcast %47 : vector<1x195xf32> to vector<2x195xf32>
    %49 = vector.broadcast %28 : vector<2x1xf32> to vector<2x195xf32>
    %50 = arith.addf %48, %49 : vector<2x195xf32>
    %c1_26 = arith.constant 1 : index
    %c512_27 = arith.constant 512 : index
    %51 = vector.load %arg3[%c1_26, %c512_27] : memref<8x1024xf32, #tpu.memory_space<vmem>>, vector<1x195xf32>
    %52 = vector.broadcast %51 : vector<1x195xf32> to vector<2x195xf32>
    %53 = vector.broadcast %29 : vector<2x1xf32> to vector<2x195xf32>
    %54 = arith.addf %52, %53 : vector<2x195xf32>
    %c2_28 = arith.constant 2 : index
    %c512_29 = arith.constant 512 : index
    %55 = vector.load %arg3[%c2_28, %c512_29] : memref<8x1024xf32, #tpu.memory_space<vmem>>, vector<1x195xf32>
    %56 = vector.broadcast %55 : vector<1x195xf32> to vector<2x195xf32>
    %57 = vector.broadcast %30 : vector<2x1xf32> to vector<2x195xf32>
    %58 = arith.addf %56, %57 : vector<2x195xf32>
    %59 = tpu.concatenate %50, %54, %58 in 0 : vector<2x195xf32>, vector<2x195xf32>, vector<2x195xf32> -> vector<6x195xf32>
    %60 = arith.truncf %59 : vector<6x195xf32> to vector<6x195xbf16>
    %c0_30 = arith.constant 0 : index
    %c0_31 = arith.constant 0 : index
    %61 = vector.load %arg5[%c0_30, %c0_31] : memref<195x778xbf16, #tpu.memory_space<vmem>>, vector<195x778xbf16>
    %cst_32 = arith.constant dense<0.000000e+00> : vector<6x778xf32>
    %62 = tpu.matmul %60, %61, %cst_32 {dimension_numbers = #tpu.dot_dimension_numbers<[1], [0], [0], [1], [0, 0, 1, 1], [], []>} : vector<6x195xbf16>, vector<195x778xbf16>, vector<6x778xf32> -> vector<6x778xf32>
    %c7 = arith.constant 7 : index
    %c0_33 = arith.constant 0 : index
    %63 = vector.load %arg3[%c7, %c0_33] : memref<8x1024xf32, #tpu.memory_space<vmem>>, vector<1x778xf32>
    %64 = vector.broadcast %63 : vector<1x778xf32> to vector<6x778xf32>
    %65 = arith.addf %62, %64 : vector<6x778xf32>
    %c0_34 = arith.constant 0 : index
    %c0_35 = arith.constant 0 : index
    %c0_36 = arith.constant 0 : index
    %66 = vector.load %arg7[%c0_34, %c0_35, %c0_36] : memref<1x6x778xf32, #tpu.memory_space<vmem>>, vector<1x6x778xf32>
    %67 = vector.shape_cast %66 : vector<1x6x778xf32> to vector<6x778xf32>
    %68 = vector.shape_cast %65 : vector<6x778xf32> to vector<1x6x778xf32>
    tpu.vector_store %arg7[%c0_34, %c0_35, %c0_36], %68 {strides = array<i32>} : memref<1x6x778xf32, #tpu.memory_space<vmem>>, vector<1x6x778xf32>,
    return
  }
  func.func @transform_0(%arg0: i32) -> (i32, i32, i32) {
    %c0_i32 = arith.constant 0 : i32
    %c0_i32_0 = arith.constant 0 : i32
    %c0_i32_1 = arith.constant 0 : i32
    return %arg0, %c0_i32, %c0_i32_0 : i32, i32, i32
  }
  func.func @transform_1(%arg0: i32) -> (i32, i32) {
    %c0_i32 = arith.constant 0 : i32
    %c0_i32_0 = arith.constant 0 : i32
    %c0_i32_1 = arith.constant 0 : i32
    return %c0_i32, %c0_i32_0 : i32, i32
  }
  func.func @transform_2(%arg0: i32) -> (i32, i32) {
    %c0_i32 = arith.constant 0 : i32
    %c0_i32_0 = arith.constant 0 : i32
    %c0_i32_1 = arith.constant 0 : i32
    return %c0_i32, %c0_i32_0 : i32, i32
  }
  func.func @transform_3(%arg0: i32) -> (i32, i32) {
    %c0_i32 = arith.constant 0 : i32
    %c0_i32_0 = arith.constant 0 : i32
    %c0_i32_1 = arith.constant 0 : i32
    return %c0_i32, %c0_i32_0 : i32, i32
  }
  func.func @transform_4(%arg0: i32) -> (i32, i32) {
    %c0_i32 = arith.constant 0 : i32
    %c0_i32_0 = arith.constant 0 : i32
    %c0_i32_1 = arith.constant 0 : i32
    return %c0_i32, %c0_i32_0 : i32, i32
  }
  func.func @transform_5(%arg0: i32) -> (i32, i32, i32) {
    %c0_i32 = arith.constant 0 : i32
    %c0_i32_0 = arith.constant 0 : i32
    %c0_i32_1 = arith.constant 0 : i32
    return %arg0, %c0_i32, %c0_i32_0 : i32, i32, i32
  }
  func.func @transform_6(%arg0: i32) -> (i32, i32, i32) {
    %c0_i32 = arith.constant 0 : i32
    %c0_i32_0 = arith.constant 0 : i32
    %c0_i32_1 = arith.constant 0 : i32
    return %arg0, %c0_i32, %c0_i32_0 : i32, i32, i32
  }
}

</mosaic_0001>

<llo_original>
// kernel: metro_hand_forward.1
$region0: #{metro_hand_forward.1}
  #allocation0 [shape = 'u32[]', space=smem, size = 0x4, offset = 0x4, fixed_abs, tag = 'smem constant byte address 0x4 - core index']
  #allocation1 [shape = 'u32[144,128]{1,0:T(1,128)}', space=vmem, size = 0x12000, scoped, tag = 'internal scratch']
  %s0 = inlined_call_operand.vmem [shape: f32[2,4,256], index: 0, kind: input, shape index: {}]
  %s1 = inlined_call_operand.vmem [shape: f32[4,3], index: 1, kind: input, shape index: {}]
  %s2 = inlined_call_operand.vmem [shape: f32[8,1024], index: 2, kind: input, shape index: {}]
  %s3 = inlined_call_operand.vmem [shape: bf16[216,150], index: 3, kind: input, shape index: {}]
  %s4 = inlined_call_operand.vmem [shape: bf16[195,778], index: 4, kind: input, shape index: {}]
  %s5 = inlined_call_operand.vmem [shape: f32[1,8,216], index: 5, kind: output, shape index: {0}]
  %s6 = inlined_call_operand.vmem [shape: f32[1,6,778], index: 6, kind: output, shape index: {1}]
  %7 = xla_tuple %s5, %s6
  %s8 = sld [smem:[#allocation0]]
  $region38: #{metro_hand_forward.1} parent=0
    _
  %s10 = ssub.s32 1, %s8
  %s11 = scalar_select 0, %s10, %s8
  // Predicated region
  $region2: #{metro_hand_forward.1} parent=0 // pred_check
    _
  $region3: #{metro_hand_forward.1} parent=0 // pred_check_branch
    %13 = sbr.rel (0) target = $region5
  $region4: #{metro_hand_forward.1} parent=0 // pred_region
    _
  $region5: #{metro_hand_forward.1} parent=0 // pred_fallthru
    _
  // Predicated region
  $region6: #{metro_hand_forward.1} parent=0 // pred_check
    _
  $region7: #{metro_hand_forward.1} parent=0 // pred_check_branch
    %15 = sbr.rel (0) target = $region9
  $region8: #{metro_hand_forward.1} parent=0 // pred_region
    _
  $region9: #{metro_hand_forward.1} parent=0 // pred_fallthru
    _
  // Predicated region
  $region10: #{metro_hand_forward.1} parent=0 // pred_check
    _
  $region11: #{metro_hand_forward.1} parent=0 // pred_check_branch
    %17 = sbr.rel (0) target = $region13
  $region12: #{metro_hand_forward.1} parent=0 // pred_region
    _
  $region13: #{metro_hand_forward.1} parent=0 // pred_fallthru
    _
  // Predicated region
  $region14: #{metro_hand_forward.1} parent=0 // pred_check
    _
  $region15: #{metro_hand_forward.1} parent=0 // pred_check_branch
    %19 = sbr.rel (0) target = $region17
  $region16: #{metro_hand_forward.1} parent=0 // pred_region
    _
  $region17: #{metro_hand_forward.1} parent=0 // pred_fallthru
    _
  // Predicated region
  $region18: #{metro_hand_forward.1} parent=0 // pred_check
    _
  $region19: #{metro_hand_forward.1} parent=0 // pred_check_branch
    %21 = sbr.rel (0) target = $region21
  $region20: #{metro_hand_forward.1} parent=0 // pred_region
    _
  $region21: #{metro_hand_forward.1} parent=0 // pred_fallthru
    _
  %v23 = vld [vmem:[%s0] sm:$0xff]
  %v24 = vld [vmem:[%s0 + $0x8] sm:$0xff]
  %v27 = vcombine.high %v23, %v23
  %v28 = vcombine.high %v24, %v24
  %vm31 = vcmask 1043456
  %v32 = vsel %vm31, %v23, 0.0
  %v33 = vsel %vm31, %v27, 0.0
  %v34 = vadd.f32 %v32, %v33
  %35 = vadd.xlane.f32.xlu0 %v34
  %v36 = vpop.xlane.xlu0 %35
  %v37 = vsel %vm31, %v24, 0.0
  %v38 = vsel %vm31, %v28, 0.0
  %v39 = vadd.f32 %v37, %v38
  %40 = vadd.xlane.f32.xlu0 %v39
  %v41 = vpop.xlane.xlu0 %40
  %v42 = vrcp.pop 256.0
  %v43 = vmul.f32 %v36, %v42
  %v44 = vmul.f32 %v41, %v42
  %v45 = vld [vmem:[%s1] sm:$0xf]
  %v46 = vld [vmem:[%s2 + $0x3] ss:$0 sm:$0xff]
  %v49 = vlaneseq
  %v50 = vand.u32 %v49, 127
  %v51 = vlaneseq
  %v52 = vshrl.u32 %v51, 7
  %v53 = vsub.s32 %v50, %v52
  %v54 = vrot.slane %v43, %v53
  %v55 = vlaneseq
  %v56 = vshrl.u32 %v55, 7
  %v57 = vsub.s32 %v50, %v56
  %v58 = vrot.slane %v44, %v57
  %vm59 = vcmask 1041409
  %v60 = vsel %vm59, %v58, %v54
  %vm61 = vcmask 31744
  %v62 = vsel %vm61, %v60, 0
  %v65 = vsel %vm31, %v45, 0
  %67 = vmatprep.subr.mxu0 0.0
  %68 = vmatpush1.msra.mxu0 %v65
  %69 = vmatprep.subr.mxu0 0.0
  %70 = vmatpush1.msra.mxu0 0.0
  %71 = vmatprep.subr.mxu0 0.0
  %72 = vmatpush1.msra.mxu0 0.0
  %73 = vmatprep.subr.mxu0 0.0
  %74 = vmatpush1.msra.mxu0 0.0
  %75 = vmatprep.subr.mxu0 0.0
  %76 = vmatpush1.msra.mxu0 0.0
  %77 = vmatprep.subr.mxu0 0.0
  %78 = vmatpush1.msra.mxu0 0.0
  %79 = vmatprep.subr.mxu0 0.0
  %80 = vmatpush1.msra.mxu0 0.0
  %81 = vmatprep.subr.mxu0 0.0
  %82 = vmatpush1.msra.mxu0 0.0
  %83 = vmatprep.subr.mxu0 0.0
  %84 = vmatpush1.msra.mxu0 0.0
  %85 = vmatprep.subr.mxu0 0.0
  %86 = vmatpush1.msra.mxu0 0.0
  %87 = vmatprep.subr.mxu0 0.0
  %88 = vmatpush1.msra.mxu0 0.0
  %89 = vmatprep.subr.mxu0 0.0
  %90 = vmatpush1.msra.mxu0 0.0
  %91 = vmatprep.subr.mxu0 0.0
  %92 = vmatpush1.msra.mxu0 0.0
  %93 = vmatprep.subr.mxu0 0.0
  %94 = vmatpush1.msra.mxu0 0.0
  %95 = vmatprep.subr.mxu0 0.0
  %96 = vmatpush1.msra.mxu0 0.0
  %97 = vmatprep.subr.mxu0 0.0
  %98 = vmatpush1.msra.mxu0 0.0
  %99 = vmatprep.subr.mxu0 0.0
  %100 = vmatpush1.msra.mxu0 0.0
  %101 = vmatprep.subr.mxu0 0.0
  %102 = vmatpush1.msra.mxu0 0.0
  %103 = vmatprep.subr.mxu0 0.0
  %104 = vmatpush1.msra.mxu0 0.0
  %105 = vmatprep.subr.mxu0 0.0
  %106 = vmatpush1.msra.mxu0 0.0
  %107 = vmatprep.subr.mxu0 0.0
  %108 = vmatpush1.msra.mxu0 0.0
  %109 = vmatprep.subr.mxu0 0.0
  %110 = vmatpush1.msra.mxu0 0.0
  %111 = vmatprep.subr.mxu0 0.0
  %112 = vmatpush1.msra.mxu0 0.0
  %113 = vmatprep.subr.mxu0 0.0
  %114 = vmatpush1.msra.mxu0 0.0
  %115 = vmatprep.subr.mxu0 0.0
  %116 = vmatpush1.msra.mxu0 0.0
  %117 = vmatprep.subr.mxu0 0.0
  %118 = vmatpush1.msra.mxu0 0.0
  %119 = vmatprep.subr.mxu0 0.0
  %120 = vmatpush1.msra.mxu0 0.0
  %121 = vmatprep.subr.mxu0 0.0
  %122 = vmatpush1.msra.mxu0 0.0
  %123 = vmatprep.subr.mxu0 0.0
  %124 = vmatpush1.msra.mxu0 0.0
  %125 = vmatprep.subr.mxu0 0.0
  %126 = vmatpush1.msra.mxu0 0.0
  %127 = vmatprep.subr.mxu0 0.0
  %128 = vmatpush1.msra.mxu0 0.0
  %129 = vmatprep.subr.mxu0 0.0
  %130 = vmatpush1.msra.mxu0 0.0
  %131 = vmatprep.mubr.f32.mxu0 0.0
  %132 = vmatmul.mubr.f32.gmra.mrb[0].mxu0 %v62
  %v133 = vpop.f32.mrb[0].mxu0
  %v134 = vadd.f32 %v46, %v133
  %v135 = vpop.f32.mrb[0].mxu0
  %136 = vdwg.mxu0
  %v137 = vld [vmem:[%s2 + $0xb] ss:$0 sm:$0xff]
  %v138 = vmul.f32 %v134, %v137
  %vm139 = vcmask 17408
  %v140 = vsel %vm139, %v138, 0.0
  %141 = vadd.xlane.f32.xlu0 %v140
  %v142 = vpop.xlane.xlu0 %141
  %s143 = scalar_lea.vmem %s2, 4
  %v144 = vld [vmem:[%s143] ss:$8 sm:$0x3]
  %v146 = vlaneseq
  %v147 = vshrl.u32 %v146, 7
  %v148 = vsub.s32 0, %v147
  %v149 = vrot.slane %v144, %v148
  %v150 = vlaneseq
  %v151 = vshrl.u32 %v150, 7
  %v152 = vsub.s32 1, %v151
  %v153 = vrot.slane %v144, %v152
  %v156 = vadd.f32 %v149, %v142
  %v157 = vadd.f32 %v153, %v142
  %v158 = vpack.c.bf16 %v156, %v156
  %v159 = vpack.c.bf16 %v157, %v157
  %v160 = vld [vmem:[%s3] sm:$0xff]
  %v161 = vld [vmem:[%s3 + $0x8] sm:$0xff]
  %v162 = vld [vmem:[%s3 + $0x10] sm:$0xff]
  %v163 = vld [vmem:[%s3 + $0x18] sm:$0xff]
  %v164 = vld [vmem:[%s3 + $0x20] sm:$0xff]
  %v165 = vld [vmem:[%s3 + $0x28] sm:$0xff]
  %v166 = vld [vmem:[%s3 + $0x30] sm:$0xff]
  %v167 = vld [vmem:[%s3 + $0x38] sm:$0xff]
  %v168 = vld [vmem:[%s3 + $0x40] sm:$0xff]
  %v169 = vld [vmem:[%s3 + $0x48] sm:$0xff]
  %v170 = vld [vmem:[%s3 + $0x50] sm:$0xff]
  %v171 = vld [vmem:[%s3 + $0x58] sm:$0xff]
  %v172 = vld [vmem:[%s3 + $0x60] sm:$0xff]
  %v173 = vld [vmem:[%s3 + $0x68] sm:$0xff]
  %v174 = vld [vmem:[%s3 + $0x70] sm:$0xff]
  %v175 = vld [vmem:[%s3 + $0x78] sm:$0xff]
  %v176 = vld [vmem:[%s3 + $0x80] sm:$0xff]
  %v177 = vld [vmem:[%s3 + $0x88] sm:$0xff]
  %v178 = vld [vmem:[%s3 + $0x90] sm:$0xff]
  %v179 = vld [vmem:[%s3 + $0x98] sm:$0xff]
  %v180 = vld [vmem:[%s3 + $0xa0] sm:$0xff]
  %v181 = vld [vmem:[%s3 + $0xa8] sm:$0xff]
  %v182 = vld [vmem:[%s3 + $0xb0] sm:$0xff]
  %v183 = vld [vmem:[%s3 + $0xb8] sm:$0xff]
  %v184 = vld [vmem:[%s3 + $0xc0] sm:$0xff]
  %v185 = vld [vmem:[%s3 + $0xc8] sm:$0xff]
  %v186 = vld [vmem:[%s3 + $0xd0] sm:$0xff]
  %s187 = scalar_lea.vmem %s2, 6
  %v188 = vld [vmem:[%s187] ss:$8 sm:$0x3]
  %v190 = vlaneseq
  %v191 = vshrl.u32 %v190, 7
  %v192 = vsub.s32 0, %v191
  %v193 = vrot.slane %v188, %v192
  %v194 = vlaneseq
  %v195 = vshrl.u32 %v194, 7
  %v196 = vsub.s32 1, %v195
  %v197 = vrot.slane %v188, %v196
  %v227 = vunpack.c.l.b16 %v160
  %v228 = vunpack.c.h.b16 %v160
  %v229 = vunpack.c.l.b16 %v161
  %v230 = vunpack.c.h.b16 %v161
  %v231 = vunpack.c.l.b16 %v162
  %v232 = vunpack.c.h.b16 %v162
  %v233 = vunpack.c.l.b16 %v163
  %v234 = vunpack.c.h.b16 %v163
  %v235 = vunpack.c.l.b16 %v164
  %v236 = vunpack.c.h.b16 %v164
  %v237 = vunpack.c.l.b16 %v165
  %v238 = vunpack.c.h.b16 %v165
  %v239 = vunpack.c.l.b16 %v166
  %v240 = vunpack.c.h.b16 %v166
  %v241 = vunpack.c.l.b16 %v167
  %v242 = vunpack.c.h.b16 %v167
  %v243 = vunpack.c.l.b16 %v168
  %v244 = vunpack.c.h.b16 %v168
  %v245 = vunpack.c.l.b16 %v169
  %v246 = vunpack.c.h.b16 %v169
  %v247 = vunpack.c.l.b16 %v170
  %v248 = vunpack.c.h.b16 %v170
  %v249 = vunpack.c.l.b16 %v171
  %v250 = vunpack.c.h.b16 %v171
  %v251 = vunpack.c.l.b16 %v172
  %v252 = vunpack.c.h.b16 %v172
  %v253 = vunpack.c.l.b16 %v173
  %v254 = vunpack.c.h.b16 %v173
  %v255 = vunpack.c.l.b16 %v174
  %v256 = vunpack.c.h.b16 %v174
  %v257 = vunpack.c.l.b16 %v175
  %v258 = vunpack.c.h.b16 %v175
  %v259 = vunpack.c.l.b16 %v176
  %v260 = vunpack.c.h.b16 %v176
  %v261 = vunpack.c.l.b16 %v177
  %v262 = vunpack.c.h.b16 %v177
  %v263 = vunpack.c.l.b16 %v178
  %v264 = vunpack.c.h.b16 %v178
  %v265 = vunpack.c.l.b16 %v179
  %v266 = vunpack.c.h.b16 %v179
  %v267 = vunpack.c.l.b16 %v180
  %v268 = vunpack.c.h.b16 %v180
  %v269 = vunpack.c.l.b16 %v181
  %v270 = vunpack.c.h.b16 %v181
  %v271 = vunpack.c.l.b16 %v182
  %v272 = vunpack.c.h.b16 %v182
  %v273 = vunpack.c.l.b16 %v183
  %v274 = vunpack.c.h.b16 %v183
  %v275 = vunpack.c.l.b16 %v184
  %v276 = vunpack.c.h.b16 %v184
  %v277 = vunpack.c.l.b16 %v185
  %v278 = vunpack.c.h.b16 %v185
  %v279 = vunpack.c.l.b16 %v186
  %v280 = vunpack.c.h.b16 %v186
  %v281 = vpack.c.b16 %v229, %v227
  %v282 = vpack.c.b16 %v230, %v228
  %v283 = vpack.c.b16 %v233, %v231
  %v284 = vpack.c.b16 %v234, %v232
  %v285 = vpack.c.b16 %v237, %v235
  %v286 = vpack.c.b16 %v238, %v236
  %v287 = vpack.c.b16 %v241, %v239
  %v288 = vpack.c.b16 %v242, %v240
  %v289 = vpack.c.b16 %v245, %v243
  %v290 = vpack.c.b16 %v246, %v244
  %v291 = vpack.c.b16 %v249, %v247
  %v292 = vpack.c.b16 %v250, %v248
  %v293 = vpack.c.b16 %v253, %v251
  %v294 = vpack.c.b16 %v254, %v252
  %v295 = vpack.c.b16 %v257, %v255
  %v296 = vpack.c.b16 %v258, %v256
  %v297 = vpack.c.b16 %v261, %v259
  %v298 = vpack.c.b16 %v262, %v260
  %v299 = vpack.c.b16 %v265, %v263
  %v300 = vpack.c.b16 %v266, %v264
  %v301 = vpack.c.b16 %v269, %v267
  %v302 = vpack.c.b16 %v270, %v268
  %v303 = vpack.c.b16 %v273, %v271
  %v304 = vpack.c.b16 %v274, %v272
  %v305 = vpack.c.b16 %v277, %v275
  %v306 = vpack.c.b16 %v278, %v276
  %v307 = vpack.c.b16 %v279, %v279
  %v308 = vpack.c.b16 %v280, %v280
  %vm335 = vcmask 719872
  %v337 = vsel %vm335, %v159, 0
  %v340 = vsel %vm31, %v307, 0
  %v343 = vsel %vm31, %v308, 0
  %345 = vmatprep.subr.bf16.mxu0 %v282
  %346 = vmatpush1.bf16.msra.mxu0 %v281
  %347 = vmatprep.subr.bf16.mxu0 %v284
  %348 = vmatpush1.bf16.msra.mxu0 %v283
  %349 = vmatprep.subr.bf16.mxu0 %v286
  %350 = vmatpush1.bf16.msra.mxu0 %v285
  %351 = vmatprep.subr.bf16.mxu0 %v288
  %352 = vmatpush1.bf16.msra.mxu0 %v287
  %353 = vmatprep.subr.bf16.mxu0 %v290
  %354 = vmatpush1.bf16.msra.mxu0 %v289
  %355 = vmatprep.subr.bf16.mxu0 %v292
  %356 = vmatpush1.bf16.msra.mxu0 %v291
  %357 = vmatprep.subr.bf16.mxu0 %v294
  %358 = vmatpush1.bf16.msra.mxu0 %v293
  %359 = vmatprep.subr.bf16.mxu0 %v296
  %360 = vmatpush1.bf16.msra.mxu0 %v295
  %361 = vmatprep.subr.bf16.mxu0 %v298
  %362 = vmatpush1.bf16.msra.mxu0 %v297
  %363 = vmatprep.subr.bf16.mxu0 %v300
  %364 = vmatpush1.bf16.msra.mxu0 %v299
  %365 = vmatprep.subr.bf16.mxu0 %v302
  %366 = vmatpush1.bf16.msra.mxu0 %v301
  %367 = vmatprep.subr.bf16.mxu0 %v304
  %368 = vmatpush1.bf16.msra.mxu0 %v303
  %369 = vmatprep.subr.bf16.mxu0 %v306
  %370 = vmatpush1.bf16.msra.mxu0 %v305
  %371 = vmatprep.subr.bf16.mxu0 %v343
  %372 = vmatpush1.bf16.msra.mxu0 %v340
  %373 = vmatprep.subr.bf16.mxu0 0
  %374 = vmatpush1.bf16.msra.mxu0 0
  %375 = vmatprep.subr.bf16.mxu0 0
  %376 = vmatpush1.bf16.msra.mxu0 0
  %377 = vmatprep.mubr.bf16.mxu0 %v337
  %378 = vmatmul.mubr.bf16.gmra.mrb[0].mxu0 %v158
  %v379 = vpop.f32.mrb[0].mxu0
  %v380 = vadd.f32 %v193, %v379
  %v381 = vpop.f32.mrb[0].mxu0
  %v382 = vadd.f32 %v197, %v381
  %v383 = vpop.f32.mrb[0].mxu0
  %v384 = vpop.f32.mrb[0].mxu0
  %385 = vdwg.mxu0
  %v386 = vld [vmem:[%s2 + $0x10] sm:$0x7]
  %v387 = vld [vmem:[%s2 + $0x18] sm:$0x7]
  %v388 = vld [vmem:[%s2 + $0x5] ss:$0 sm:$0xff]
  %vm389 = vcmask 179200
  %v391 = vsel %vm389, %v382, 0
  %v394 = vsel %vm389, %v387, 0
  %396 = vmatprep.subr.mxu0 %v394
  %397 = vmatpush1.xpose.msra.mxu0 %v386
  %398 = vmatprep.subr.mxu0 0.0
  %399 = vmatpush1.xpose.msra.mxu0 0.0
  %400 = vmatprep.subr.mxu0 0.0
  %401 = vmatpush1.xpose.msra.mxu0 0.0
  %402 = vmatprep.subr.mxu0 0.0
  %403 = vmatpush1.xpose.msra.mxu0 0.0
  %404 = vmatprep.subr.mxu0 0.0
  %405 = vmatpush1.xpose.msra.mxu0 0.0
  %406 = vmatprep.subr.mxu0 0.0
  %407 = vmatpush1.xpose.msra.mxu0 0.0
  %408 = vmatprep.subr.mxu0 0.0
  %409 = vmatpush1.xpose.msra.mxu0 0.0
  %410 = vmatprep.subr.mxu0 0.0
  %411 = vmatpush1.xpose.msra.mxu0 0.0
  %412 = vmatprep.subr.mxu0 0.0
  %413 = vmatpush1.xpose.msra.mxu0 0.0
  %414 = vmatprep.subr.mxu0 0.0
  %415 = vmatpush1.xpose.msra.mxu0 0.0
  %416 = vmatprep.subr.mxu0 0.0
  %417 = vmatpush1.xpose.msra.mxu0 0.0
  %418 = vmatprep.subr.mxu0 0.0
  %419 = vmatpush1.xpose.msra.mxu0 0.0
  %420 = vmatprep.subr.mxu0 0.0
  %421 = vmatpush1.xpose.msra.mxu0 0.0
  %422 = vmatprep.subr.mxu0 0.0
  %423 = vmatpush1.xpose.msra.mxu0 0.0
  %424 = vmatprep.subr.mxu0 0.0
  %425 = vmatpush1.xpose.msra.mxu0 0.0
  %426 = vmatprep.subr.mxu0 0.0
  %427 = vmatpush1.xpose.msra.mxu0 0.0
  %428 = vmatprep.subr.mxu0 0.0
  %429 = vmatpush1.xpose.msra.mxu0 0.0
  %430 = vmatprep.subr.mxu0 0.0
  %431 = vmatpush1.xpose.msra.mxu0 0.0
  %432 = vmatprep.subr.mxu0 0.0
  %433 = vmatpush1.xpose.msra.mxu0 0.0
  %434 = vmatprep.subr.mxu0 0.0
  %435 = vmatpush1.xpose.msra.mxu0 0.0
  %436 = vmatprep.subr.mxu0 0.0
  %437 = vmatpush1.xpose.msra.mxu0 0.0
  %438 = vmatprep.subr.mxu0 0.0
  %439 = vmatpush1.xpose.msra.mxu0 0.0
  %440 = vmatprep.subr.mxu0 0.0
  %441 = vmatpush1.xpose.msra.mxu0 0.0
  %442 = vmatprep.subr.mxu0 0.0
  %443 = vmatpush1.xpose.msra.mxu0 0.0
  %444 = vmatprep.subr.mxu0 0.0
  %445 = vmatpush1.xpose.msra.mxu0 0.0
  %446 = vmatprep.subr.mxu0 0.0
  %447 = vmatpush1.xpose.msra.mxu0 0.0
  %448 = vmatprep.subr.mxu0 0.0
  %449 = vmatpush1.xpose.msra.mxu0 0.0
  %450 = vmatprep.subr.mxu0 0.0
  %451 = vmatpush1.xpose.msra.mxu0 0.0
  %452 = vmatprep.subr.mxu0 0.0
  %453 = vmatpush1.xpose.msra.mxu0 0.0
  %454 = vmatprep.subr.mxu0 0.0
  %455 = vmatpush1.xpose.msra.mxu0 0.0
  %456 = vmatprep.subr.mxu0 0.0
  %457 = vmatpush1.xpose.msra.mxu0 0.0
  %458 = vmatprep.subr.mxu0 0.0
  %459 = vmatpush1.xpose.msra.mxu0 0.0
  %460 = vmatprep.mubr.f32.mxu0 %v391
  %461 = vmatmul.mubr.f32.gmra.mrb[0].mxu0 %v380
  %v462 = vpop.f32.mrb[0].mxu0
  %v463 = vadd.f32 %v388, %v462
  %v464 = vpop.f32.mrb[0].mxu0
  %465 = vdwg.mxu0
  %vm466 = vcmask 23552
  %v467 = vsel %vm466, %v463, 0.0
  %v468 = vld [vmem:[%s2] ss:$8 sm:$0x3]
  %v470 = vlaneseq
  %v471 = vshrl.u32 %v470, 7
  %v472 = vsub.s32 0, %v471
  %v473 = vrot.slane %v468, %v472
  %v474 = vlaneseq
  %v475 = vshrl.u32 %v474, 7
  %v476 = vsub.s32 1, %v475
  %v477 = vrot.slane %v468, %v476
  %481 = vset.pattern.permute.xlu0 0
  %482 = vperm.xlu0 %481, %v134
  %v483 = vpop.permute.xlu0 %482
  %v485 = vadd.f32 %v473, %v483
  %v486 = vadd.f32 %v477, %v483
  %s487 = scalar_lea.vmem %s2, 1
  %v488 = vld [vmem:[%s487] ss:$8 sm:$0x3]
  %v490 = vlaneseq
  %v491 = vshrl.u32 %v490, 7
  %v492 = vsub.s32 0, %v491
  %v493 = vrot.slane %v488, %v492
  %v494 = vlaneseq
  %v495 = vshrl.u32 %v494, 7
  %v496 = vsub.s32 1, %v495
  %v497 = vrot.slane %v488, %v496
  %500 = vset.pattern.permute.xlu0 1
  %501 = vperm.xlu0 %500, %v134
  %v502 = vpop.permute.xlu0 %501
  %v504 = vadd.f32 %v493, %v502
  %v505 = vadd.f32 %v497, %v502
  %s506 = scalar_lea.vmem %s2, 2
  %v507 = vld [vmem:[%s506] ss:$8 sm:$0x3]
  %v509 = vlaneseq
  %v510 = vshrl.u32 %v509, 7
  %v511 = vsub.s32 0, %v510
  %v512 = vrot.slane %v507, %v511
  %v513 = vlaneseq
  %v514 = vshrl.u32 %v513, 7
  %v515 = vsub.s32 1, %v514
  %v516 = vrot.slane %v507, %v515
  %519 = vset.pattern.permute.xlu0 2
  %520 = vperm.xlu0 %519, %v134
  %v521 = vpop.permute.xlu0 %520
  %v523 = vadd.f32 %v512, %v521
  %v524 = vadd.f32 %v516, %v521
  %v527 = vrot.slane %v504, 6
  %v528 = vrot.slane %v505, 6
  %v533 = vrot.slane %v523, 4
  %v534 = vrot.slane %v524, 4
  %v539 = vrot.slane %v467, 2
  %v540 = vrot.slane 0.0, 2
  %vm543 = vcmask 1041408
  %v544 = vsel %vm543, %v485, %v527
  %v545 = vsel %vm543, %v486, %v528
  %v546 = vsel %vm31, %v544, %v533
  %v547 = vsel %vm31, %v545, %v534
  %vm548 = vcmask 1045504
  %v549 = vsel %vm548, %v546, %v539
  %v550 = vsel %vm548, %v547, %v540
  %551 = vst [vmem:[%s5] sm:$0xff] %v549
  %552 = vst.msk [vmem:[%s5 + $0x8] sm:$0xff] %vm335, %v550
  %s553 = scalar_lea.vmem %s2, 32
  %v554 = vld [vmem:[%s553] ss:$8 sm:$0x3]
  %v556 = vlaneseq
  %v557 = vshrl.u32 %v556, 7
  %v558 = vsub.s32 0, %v557
  %v559 = vrot.slane %v554, %v558
  %v560 = vlaneseq
  %v561 = vshrl.u32 %v560, 7
  %v562 = vsub.s32 1, %v561
  %v563 = vrot.slane %v554, %v562
  %v566 = vadd.f32 %v559, %v483
  %v567 = vadd.f32 %v563, %v483
  %s568 = scalar_lea.vmem %s2, 33
  %v569 = vld [vmem:[%s568] ss:$8 sm:$0x3]
  %v571 = vlaneseq
  %v572 = vshrl.u32 %v571, 7
  %v573 = vsub.s32 0, %v572
  %v574 = vrot.slane %v569, %v573
  %v575 = vlaneseq
  %v576 = vshrl.u32 %v575, 7
  %v577 = vsub.s32 1, %v576
  %v578 = vrot.slane %v569, %v577
  %v581 = vadd.f32 %v574, %v502
  %v582 = vadd.f32 %v578, %v502
  %s583 = scalar_lea.vmem %s2, 34
  %v584 = vld [vmem:[%s583] ss:$8 sm:$0x3]
  %v586 = vlaneseq
  %v587 = vshrl.u32 %v586, 7
  %v588 = vsub.s32 0, %v587
  %v589 = vrot.slane %v584, %v588
  %v590 = vlaneseq
  %v591 = vshrl.u32 %v590, 7
  %v592 = vsub.s32 1, %v591
  %v593 = vrot.slane %v584, %v592
  %v596 = vadd.f32 %v589, %v521
  %v597 = vadd.f32 %v593, %v521
  %v600 = vrot.slane %v581, 6
  %v601 = vrot.slane %v582, 6
  %v606 = vrot.slane %v596, 4
  %v607 = vrot.slane %v597, 4
  %v610 = vsel %vm543, %v566, %v600
  %v611 = vsel %vm543, %v567, %v601
  %v612 = vsel %vm31, %v610, %v606
  %v613 = vsel %vm31, %v611, %v607
  %v614 = vpack.c.bf16 %v612, %v612
  %v615 = vpack.c.bf16 %v613, %v613
  %v616 = vld [vmem:[%s4] sm:$0xff]
  %v617 = vld [vmem:[%s4 + $0x8] sm:$0xff]
  %v618 = vld [vmem:[%s4 + $0x10] sm:$0xff]
  %v619 = vld [vmem:[%s4 + $0x18] sm:$0xf]
  %v620 = vld [vmem:[%s4 + $0x1c] sm:$0xff]
  %v621 = vld [vmem:[%s4 + $0x24] sm:$0xff]
  %v622 = vld [vmem:[%s4 + $0x2c] sm:$0xff]
  %v623 = vld [vmem:[%s4 + $0x34] sm:$0xf]
  %v624 = vld [vmem:[%s4 + $0x38] sm:$0xff]
  %v625 = vld [vmem:[%s4 + $0x40] sm:$0xff]
  %v626 = vld [vmem:[%s4 + $0x48] sm:$0xff]
  %v627 = vld [vmem:[%s4 + $0x50] sm:$0xf]
  %v628 = vld [vmem:[%s4 + $0x54] sm:$0xff]
  %v629 = vld [vmem:[%s4 + $0x5c] sm:$0xff]
  %v630 = vld [vmem:[%s4 + $0x64] sm:$0xff]
  %v631 = vld [vmem:[%s4 + $0x6c] sm:$0xf]
  %v632 = vld [vmem:[%s4 + $0x70] sm:$0xff]
  %v633 = vld [vmem:[%s4 + $0x78] sm:$0xff]
  %v634 = vld [vmem:[%s4 + $0x80] sm:$0xff]
  %v635 = vld [vmem:[%s4 + $0x88] sm:$0xf]
  %v636 = vld [vmem:[%s4 + $0x8c] sm:$0xff]
  %v637 = vld [vmem:[%s4 + $0x94] sm:$0xff]
  %v638 = vld [vmem:[%s4 + $0x9c] sm:$0xff]
  %v639 = vld [vmem:[%s4 + $0xa4] sm:$0xf]
  %v640 = vld [vmem:[%s4 + $0xa8] sm:$0xff]
  %v641 = vld [vmem:[%s4 + $0xb0] sm:$0xff]
  %v642 = vld [vmem:[%s4 + $0xb8] sm:$0xff]
  %v643 = vld [vmem:[%s4 + $0xc0] sm:$0xf]
  %v644 = vld [vmem:[%s4 + $0xc4] sm:$0xff]
  %v645 = vld [vmem:[%s4 + $0xcc] sm:$0xff]
  %v646 = vld [vmem:[%s4 + $0xd4] sm:$0xff]
  %v647 = vld [vmem:[%s4 + $0xdc] sm:$0xf]
  %v648 = vld [vmem:[%s4 + $0xe0] sm:$0xff]
  %v649 = vld [vmem:[%s4 + $0xe8] sm:$0xff]
  %v650 = vld [vmem:[%s4 + $0xf0] sm:$0xff]
  %v651 = vld [vmem:[%s4 + $0xf8] sm:$0xf]
  %v652 = vld [vmem:[%s4 + $0xfc] sm:$0xff]
  %v653 = vld [vmem:[%s4 + $0x104] sm:$0xff]
  %v654 = vld [vmem:[%s4 + $0x10c] sm:$0xff]
  %v655 = vld [vmem:[%s4 + $0x114] sm:$0xf]
  %v656 = vld [vmem:[%s4 + $0x118] sm:$0xff]
  %v657 = vld [vmem:[%s4 + $0x120] sm:$0xff]
  %v658 = vld [vmem:[%s4 + $0x128] sm:$0xff]
  %v659 = vld [vmem:[%s4 + $0x130] sm:$0xf]
  %v660 = vld [vmem:[%s4 + $0x134] sm:$0xff]
  %v661 = vld [vmem:[%s4 + $0x13c] sm:$0xff]
  %v662 = vld [vmem:[%s4 + $0x144] sm:$0xff]
  %v663 = vld [vmem:[%s4 + $0x14c] sm:$0xf]
  %v664 = vld [vmem:[%s4 + $0x150] sm:$0xff]
  %v665 = vld [vmem:[%s4 + $0x158] sm:$0xff]
  %v666 = vld [vmem:[%s4 + $0x160] sm:$0xff]
  %v667 = vld [vmem:[%s4 + $0x168] sm:$0xf]
  %v668 = vld [vmem:[%s4 + $0x16c] sm:$0xff]
  %v669 = vld [vmem:[%s4 + $0x174] sm:$0xff]
  %v670 = vld [vmem:[%s4 + $0x17c] sm:$0xff]
  %v671 = vld [vmem:[%s4 + $0x184] sm:$0xf]
  %v672 = vld [vmem:[%s4 + $0x188] sm:$0xff]
  %v673 = vld [vmem:[%s4 + $0x190] sm:$0xff]
  %v674 = vld [vmem:[%s4 + $0x198] sm:$0xff]
  %v675 = vld [vmem:[%s4 + $0x1a0] sm:$0xf]
  %v676 = vld [vmem:[%s4 + $0x1a4] sm:$0xff]
  %v677 = vld [vmem:[%s4 + $0x1ac] sm:$0xff]
  %v678 = vld [vmem:[%s4 + $0x1b4] sm:$0xff]
  %v679 = vld [vmem:[%s4 + $0x1bc] sm:$0xf]
  %v680 = vld [vmem:[%s4 + $0x1c0] sm:$0xff]
  %v681 = vld [vmem:[%s4 + $0x1c8] sm:$0xff]
  %v682 = vld [vmem:[%s4 + $0x1d0] sm:$0xff]
  %v683 = vld [vmem:[%s4 + $0x1d8] sm:$0xf]
  %v684 = vld [vmem:[%s4 + $0x1dc] sm:$0xff]
  %v685 = vld [vmem:[%s4 + $0x1e4] sm:$0xff]
  %v686 = vld [vmem:[%s4 + $0x1ec] sm:$0xff]
  %v687 = vld [vmem:[%s4 + $0x1f4] sm:$0xf]
  %v688 = vld [vmem:[%s4 + $0x1f8] sm:$0xff]
  %v689 = vld [vmem:[%s4 + $0x200] sm:$0xff]
  %v690 = vld [vmem:[%s4 + $0x208] sm:$0xff]
  %v691 = vld [vmem:[%s4 + $0x210] sm:$0xf]
  %v692 = vld [vmem:[%s4 + $0x214] sm:$0xff]
  %v693 = vld [vmem:[%s4 + $0x21c] sm:$0xff]
  %v694 = vld [vmem:[%s4 + $0x224] sm:$0xff]
  %v695 = vld [vmem:[%s4 + $0x22c] sm:$0xf]
  %v696 = vld [vmem:[%s4 + $0x230] sm:$0xff]
  %v697 = vld [vmem:[%s4 + $0x238] sm:$0xff]
  %v698 = vld [vmem:[%s4 + $0x240] sm:$0xff]
  %v699 = vld [vmem:[%s4 + $0x248] sm:$0xf]
  %v700 = vld [vmem:[%s4 + $0x24c] sm:$0xff]
  %v701 = vld [vmem:[%s4 + $0x254] sm:$0xff]
  %v702 = vld [vmem:[%s4 + $0x25c] sm:$0xff]
  %v703 = vld [vmem:[%s4 + $0x264] sm:$0xf]
  %v704 = vld [vmem:[%s4 + $0x268] sm:$0xff]
  %v705 = vld [vmem:[%s4 + $0x270] sm:$0xff]
  %v706 = vld [vmem:[%s4 + $0x278] sm:$0xff]
  %v707 = vld [vmem:[%s4 + $0x280] sm:$0xf]
  %v708 = vld [vmem:[%s4 + $0x284] sm:$0xff]
  %v709 = vld [vmem:[%s4 + $0x28c] sm:$0xff]
  %v710 = vld [vmem:[%s4 + $0x294] sm:$0xff]
  %v711 = vld [vmem:[%s4 + $0x29c] sm:$0xf]
  %v712 = vld [vmem:[%s4 + $0x2a0] sm:$0x33]
  %v713 = vld [vmem:[%s4 + $0x2a8] sm:$0x33]
  %v714 = vld [vmem:[%s4 + $0x2b0] sm:$0x33]
  %v715 = vld [vmem:[%s4 + $0x2b8] sm:$0x3]
  %s716 = scalar_lea.vmem %s2, 7
  %v717 = vld [vmem:[%s716] ss:$8 sm:$0xf]
  %v718 = vld [vmem:[%s716] ss:$8 sm:$0x70]
  %v719 = vor.u32 %v717, %v718
  %v721 = vlaneseq
  %v722 = vshrl.u32 %v721, 7
  %v723 = vsub.s32 0, %v722
  %v724 = vrot.slane %v719, %v723
  %v725 = vlaneseq
  %v726 = vshrl.u32 %v725, 7
  %v727 = vsub.s32 1, %v726
  %v728 = vrot.slane %v719, %v727
  %v729 = vlaneseq
  %v730 = vshrl.u32 %v729, 7
  %v731 = vsub.s32 2, %v730
  %v732 = vrot.slane %v719, %v731
  %v733 = vlaneseq
  %v734 = vshrl.u32 %v733, 7
  %v735 = vsub.s32 3, %v734
  %v736 = vrot.slane %v719, %v735
  %v737 = vlaneseq
  %v738 = vshrl.u32 %v737, 7
  %v739 = vsub.s32 4, %v738
  %v740 = vrot.slane %v719, %v739
  %v741 = vlaneseq
  %v742 = vshrl.u32 %v741, 7
  %v743 = vsub.s32 5, %v742
  %v744 = vrot.slane %v719, %v743
  %v745 = vlaneseq
  %v746 = vshrl.u32 %v745, 7
  %v747 = vsub.s32 6, %v746
  %v748 = vrot.slane %v719, %v747
  %v856 = vunpack.c.l.b16 %v616
  %v857 = vunpack.c.h.b16 %v616
  %v858 = vunpack.c.l.b16 %v617
  %v859 = vunpack.c.h.b16 %v617
  %v860 = vunpack.c.l.b16 %v618
  %v861 = vunpack.c.h.b16 %v618
  %v862 = vunpack.c.l.b16 %v619
  %v863 = vunpack.c.l.b16 %v620
  %v864 = vunpack.c.h.b16 %v620
  %v865 = vunpack.c.l.b16 %v621
  %v866 = vunpack.c.h.b16 %v621
  %v867 = vunpack.c.l.b16 %v622
  %v868 = vunpack.c.h.b16 %v622
  %v869 = vunpack.c.l.b16 %v623
  %v870 = vunpack.c.l.b16 %v624
  %v871 = vunpack.c.h.b16 %v624
  %v872 = vunpack.c.l.b16 %v625
  %v873 = vunpack.c.h.b16 %v625
  %v874 = vunpack.c.l.b16 %v626
  %v875 = vunpack.c.h.b16 %v626
  %v876 = vunpack.c.l.b16 %v627
  %v877 = vunpack.c.l.b16 %v628
  %v878 = vunpack.c.h.b16 %v628
  %v879 = vunpack.c.l.b16 %v629
  %v880 = vunpack.c.h.b16 %v629
  %v881 = vunpack.c.l.b16 %v630
  %v882 = vunpack.c.h.b16 %v630
  %v883 = vunpack.c.l.b16 %v631
  %v884 = vunpack.c.l.b16 %v632
  %v885 = vunpack.c.h.b16 %v632
  %v886 = vunpack.c.l.b16 %v633
  %v887 = vunpack.c.h.b16 %v633
  %v888 = vunpack.c.l.b16 %v634
  %v889 = vunpack.c.h.b16 %v634
  %v890 = vunpack.c.l.b16 %v635
  %v891 = vunpack.c.l.b16 %v636
  %v892 = vunpack.c.h.b16 %v636
  %v893 = vunpack.c.l.b16 %v637
  %v894 = vunpack.c.h.b16 %v637
  %v895 = vunpack.c.l.b16 %v638
  %v896 = vunpack.c.h.b16 %v638
  %v897 = vunpack.c.l.b16 %v639
  %v898 = vunpack.c.l.b16 %v640
  %v899 = vunpack.c.h.b16 %v640
  %v900 = vunpack.c.l.b16 %v641
  %v901 = vunpack.c.h.b16 %v641
  %v902 = vunpack.c.l.b16 %v642
  %v903 = vunpack.c.h.b16 %v642
  %v904 = vunpack.c.l.b16 %v643
  %v905 = vunpack.c.l.b16 %v644
  %v906 = vunpack.c.h.b16 %v644
  %v907 = vunpack.c.l.b16 %v645
  %v908 = vunpack.c.h.b16 %v645
  %v909 = vunpack.c.l.b16 %v646
  %v910 = vunpack.c.h.b16 %v646
  %v911 = vunpack.c.l.b16 %v647
  %v912 = vunpack.c.l.b16 %v648
  %v913 = vunpack.c.h.b16 %v648
  %v914 = vunpack.c.l.b16 %v649
  %v915 = vunpack.c.h.b16 %v649
  %v916 = vunpack.c.l.b16 %v650
  %v917 = vunpack.c.h.b16 %v650
  %v918 = vunpack.c.l.b16 %v651
  %v919 = vunpack.c.l.b16 %v652
  %v920 = vunpack.c.h.b16 %v652
  %v921 = vunpack.c.l.b16 %v653
  %v922 = vunpack.c.h.b16 %v653
  %v923 = vunpack.c.l.b16 %v654
  %v924 = vunpack.c.h.b16 %v654
  %v925 = vunpack.c.l.b16 %v655
  %v926 = vunpack.c.l.b16 %v656
  %v927 = vunpack.c.h.b16 %v656
  %v928 = vunpack.c.l.b16 %v657
  %v929 = vunpack.c.h.b16 %v657
  %v930 = vunpack.c.l.b16 %v658
  %v931 = vunpack.c.h.b16 %v658
  %v932 = vunpack.c.l.b16 %v659
  %v933 = vunpack.c.l.b16 %v660
  %v934 = vunpack.c.h.b16 %v660
  %v935 = vunpack.c.l.b16 %v661
  %v936 = vunpack.c.h.b16 %v661
  %v937 = vunpack.c.l.b16 %v662
  %v938 = vunpack.c.h.b16 %v662
  %v939 = vunpack.c.l.b16 %v663
  %v940 = vunpack.c.l.b16 %v664
  %v941 = vunpack.c.h.b16 %v664
  %v942 = vunpack.c.l.b16 %v665
  %v943 = vunpack.c.h.b16 %v665
  %v944 = vunpack.c.l.b16 %v666
  %v945 = vunpack.c.h.b16 %v666
  %v946 = vunpack.c.l.b16 %v667
  %v947 = vunpack.c.l.b16 %v668
  %v948 = vunpack.c.h.b16 %v668
  %v949 = vunpack.c.l.b16 %v669
  %v950 = vunpack.c.h.b16 %v669
  %v951 = vunpack.c.l.b16 %v670
  %v952 = vunpack.c.h.b16 %v670
  %v953 = vunpack.c.l.b16 %v671
  %v954 = vunpack.c.l.b16 %v672
  %v955 = vunpack.c.h.b16 %v672
  %v956 = vunpack.c.l.b16 %v673
  %v957 = vunpack.c.h.b16 %v673
  %v958 = vunpack.c.l.b16 %v674
  %v959 = vunpack.c.h.b16 %v674
  %v960 = vunpack.c.l.b16 %v675
  %v961 = vunpack.c.l.b16 %v676
  %v962 = vunpack.c.h.b16 %v676
  %v963 = vunpack.c.l.b16 %v677
  %v964 = vunpack.c.h.b16 %v677
  %v965 = vunpack.c.l.b16 %v678
  %v966 = vunpack.c.h.b16 %v678
  %v967 = vunpack.c.l.b16 %v679
  %v968 = vunpack.c.l.b16 %v680
  %v969 = vunpack.c.h.b16 %v680
  %v970 = vunpack.c.l.b16 %v681
  %v971 = vunpack.c.h.b16 %v681
  %v972 = vunpack.c.l.b16 %v682
  %v973 = vunpack.c.h.b16 %v682
  %v974 = vunpack.c.l.b16 %v683
  %v975 = vunpack.c.l.b16 %v684
  %v976 = vunpack.c.h.b16 %v684
  %v977 = vunpack.c.l.b16 %v685
  %v978 = vunpack.c.h.b16 %v685
  %v979 = vunpack.c.l.b16 %v686
  %v980 = vunpack.c.h.b16 %v686
  %v981 = vunpack.c.l.b16 %v687
  %v982 = vunpack.c.l.b16 %v688
  %v983 = vunpack.c.h.b16 %v688
  %v984 = vunpack.c.l.b16 %v689
  %v985 = vunpack.c.h.b16 %v689
  %v986 = vunpack.c.l.b16 %v690
  %v987 = vunpack.c.h.b16 %v690
  %v988 = vunpack.c.l.b16 %v691
  %v989 = vunpack.c.l.b16 %v692
  %v990 = vunpack.c.h.b16 %v692
  %v991 = vunpack.c.l.b16 %v693
  %v992 = vunpack.c.h.b16 %v693
  %v993 = vunpack.c.l.b16 %v694
  %v994 = vunpack.c.h.b16 %v694
  %v995 = vunpack.c.l.b16 %v695
  %v996 = vunpack.c.l.b16 %v696
  %v997 = vunpack.c.h.b16 %v696
  %v998 = vunpack.c.l.b16 %v697
  %v999 = vunpack.c.h.b16 %v697
  %v1000 = vunpack.c.l.b16 %v698
  %v1001 = vunpack.c.h.b16 %v698
  %v1002 = vunpack.c.l.b16 %v699
  %v1003 = vunpack.c.l.b16 %v700
  %v1004 = vunpack.c.h.b16 %v700
  %v1005 = vunpack.c.l.b16 %v701
  %v1006 = vunpack.c.h.b16 %v701
  %v1007 = vunpack.c.l.b16 %v702
  %v1008 = vunpack.c.h.b16 %v702
  %v1009 = vunpack.c.l.b16 %v703
  %v1010 = vunpack.c.l.b16 %v704
  %v1011 = vunpack.c.h.b16 %v704
  %v1012 = vunpack.c.l.b16 %v705
  %v1013 = vunpack.c.h.b16 %v705
  %v1014 = vunpack.c.l.b16 %v706
  %v1015 = vunpack.c.h.b16 %v706
  %v1016 = vunpack.c.l.b16 %v707
  %v1017 = vunpack.c.l.b16 %v708
  %v1018 = vunpack.c.h.b16 %v708
  %v1019 = vunpack.c.l.b16 %v709
  %v1020 = vunpack.c.h.b16 %v709
  %v1021 = vunpack.c.l.b16 %v710
  %v1022 = vunpack.c.h.b16 %v710
  %v1023 = vunpack.c.l.b16 %v711
  %v1024 = vunpack.c.l.b16 %v712
  %v1025 = vunpack.c.h.b16 %v712
  %v1026 = vunpack.c.l.b16 %v713
  %v1027 = vunpack.c.h.b16 %v713
  %v1028 = vunpack.c.l.b16 %v714
  %v1029 = vunpack.c.h.b16 %v714
  %v1030 = vunpack.c.l.b16 %v715
  %v1031 = vpack.c.b16 %v863, %v856
  %v1032 = vpack.c.b16 %v864, %v857
  %v1033 = vpack.c.b16 %v865, %v858
  %v1034 = vpack.c.b16 %v866, %v859
  %v1035 = vpack.c.b16 %v867, %v860
  %v1036 = vpack.c.b16 %v868, %v861
  %v1037 = vpack.c.b16 %v869, %v862
  %v1038 = vpack.c.b16 %v877, %v870
  %v1039 = vpack.c.b16 %v878, %v871
  %v1040 = vpack.c.b16 %v879, %v872
  %v1041 = vpack.c.b16 %v880, %v873
  %v1042 = vpack.c.b16 %v881, %v874
  %v1043 = vpack.c.b16 %v882, %v875
  %v1044 = vpack.c.b16 %v883, %v876
  %v1045 = vpack.c.b16 %v891, %v884
  %v1046 = vpack.c.b16 %v892, %v885
  %v1047 = vpack.c.b16 %v893, %v886
  %v1048 = vpack.c.b16 %v894, %v887
  %v1049 = vpack.c.b16 %v895, %v888
  %v1050 = vpack.c.b16 %v896, %v889
  %v1051 = vpack.c.b16 %v897, %v890
  %v1052 = vpack.c.b16 %v905, %v898
  %v1053 = vpack.c.b16 %v906, %v899
  %v1054 = vpack.c.b16 %v907, %v900
  %v1055 = vpack.c.b16 %v908, %v901
  %v1056 = vpack.c.b16 %v909, %v902
  %v1057 = vpack.c.b16 %v910, %v903
  %v1058 = vpack.c.b16 %v911, %v904
  %v1059 = vpack.c.b16 %v919, %v912
  %v1060 = vpack.c.b16 %v920, %v913
  %v1061 = vpack.c.b16 %v921, %v914
  %v1062 = vpack.c.b16 %v922, %v915
  %v1063 = vpack.c.b16 %v923, %v916
  %v1064 = vpack.c.b16 %v924, %v917
  %v1065 = vpack.c.b16 %v925, %v918
  %v1066 = vpack.c.b16 %v933, %v926
  %v1067 = vpack.c.b16 %v934, %v927
  %v1068 = vpack.c.b16 %v935, %v928
  %v1069 = vpack.c.b16 %v936, %v929
  %v1070 = vpack.c.b16 %v937, %v930
  %v1071 = vpack.c.b16 %v938, %v931
  %v1072 = vpack.c.b16 %v939, %v932
  %v1073 = vpack.c.b16 %v947, %v940
  %v1074 = vpack.c.b16 %v948, %v941
  %v1075 = vpack.c.b16 %v949, %v942
  %v1076 = vpack.c.b16 %v950, %v943
  %v1077 = vpack.c.b16 %v951, %v944
  %v1078 = vpack.c.b16 %v952, %v945
  %v1079 = vpack.c.b16 %v953, %v946
  %v1080 = vpack.c.b16 %v961, %v954
  %v1081 = vpack.c.b16 %v962, %v955
  %v1082 = vpack.c.b16 %v963, %v956
  %v1083 = vpack.c.b16 %v964, %v957
  %v1084 = vpack.c.b16 %v965, %v958
  %v1085 = vpack.c.b16 %v966, %v959
  %v1086 = vpack.c.b16 %v967, %v960
  %v1087 = vpack.c.b16 %v975, %v968
  %v1088 = vpack.c.b16 %v976, %v969
  %v1089 = vpack.c.b16 %v977, %v970
  %v1090 = vpack.c.b16 %v978, %v971
  %v1091 = vpack.c.b16 %v979, %v972
  %v1092 = vpack.c.b16 %v980, %v973
  %v1093 = vpack.c.b16 %v981, %v974
  %v1094 = vpack.c.b16 %v989, %v982
  %v1095 = vpack.c.b16 %v990, %v983
  %v1096 = vpack.c.b16 %v991, %v984
  %v1097 = vpack.c.b16 %v992, %v985
  %v1098 = vpack.c.b16 %v993, %v986
  %v1099 = vpack.c.b16 %v994, %v987
  %v1100 = vpack.c.b16 %v995, %v988
  %v1101 = vpack.c.b16 %v1003, %v996
  %v1102 = vpack.c.b16 %v1004, %v997
  %v1103 = vpack.c.b16 %v1005, %v998
  %v1104 = vpack.c.b16 %v1006, %v999
  %v1105 = vpack.c.b16 %v1007, %v1000
  %v1106 = vpack.c.b16 %v1008, %v1001
  %v1107 = vpack.c.b16 %v1009, %v1002
  %v1108 = vpack.c.b16 %v1017, %v1010
  %v1109 = vpack.c.b16 %v1018, %v1011
  %v1110 = vpack.c.b16 %v1019, %v1012
  %v1111 = vpack.c.b16 %v1020, %v1013
  %v1112 = vpack.c.b16 %v1021, %v1014
  %v1113 = vpack.c.b16 %v1022, %v1015
  %v1114 = vpack.c.b16 %v1023, %v1016
  %v1115 = vpack.c.b16 %v1024, %v1024
  %v1116 = vpack.c.b16 %v1025, %v1025
  %v1117 = vpack.c.b16 %v1026, %v1026
  %v1118 = vpack.c.b16 %v1027, %v1027
  %v1119 = vpack.c.b16 %v1028, %v1028
  %v1120 = vpack.c.b16 %v1029, %v1029
  %v1121 = vpack.c.b16 %v1030, %v1030
  %vm1206 = vcmask 547840
  %v1208 = vsel %vm1206, %v615, 0
  %vm1210 = vcmask 1040384
  %v1211 = vsel %vm1210, 4294967295, 65535
  %v1212 = vsel %vm543, %v1211, 0
  %v1214 = vand.u32 %v1115, %v1212
  %v1217 = vand.u32 %v1116, %v1212
  %v1220 = vand.u32 %v1117, %v1212
  %v1223 = vand.u32 %v1118, %v1212
  %v1226 = vand.u32 %v1119, %v1212
  %v1229 = vand.u32 %v1120, %v1212
  %v1232 = vand.u32 %v1121, %v1212
  %1234 = vmatprep.subr.bf16.mxu0 %v1032
  %1235 = vmatpush1.bf16.msra.mxu0 %v1031
  %1236 = vmatprep.subr.bf16.mxu0 %v1039
  %1237 = vmatpush1.bf16.msra.mxu0 %v1038
  %1238 = vmatprep.subr.bf16.mxu0 %v1046
  %1239 = vmatpush1.bf16.msra.mxu0 %v1045
  %1240 = vmatprep.subr.bf16.mxu0 %v1053
  %1241 = vmatpush1.bf16.msra.mxu0 %v1052
  %1242 = vmatprep.subr.bf16.mxu0 %v1060
  %1243 = vmatpush1.bf16.msra.mxu0 %v1059
  %1244 = vmatprep.subr.bf16.mxu0 %v1067
  %1245 = vmatpush1.bf16.msra.mxu0 %v1066
  %1246 = vmatprep.subr.bf16.mxu0 %v1074
  %1247 = vmatpush1.bf16.msra.mxu0 %v1073
  %1248 = vmatprep.subr.bf16.mxu0 %v1081
  %1249 = vmatpush1.bf16.msra.mxu0 %v1080
  %1250 = vmatprep.subr.bf16.mxu0 %v1088
  %1251 = vmatpush1.bf16.msra.mxu0 %v1087
  %1252 = vmatprep.subr.bf16.mxu0 %v1095
  %1253 = vmatpush1.bf16.msra.mxu0 %v1094
  %1254 = vmatprep.subr.bf16.mxu0 %v1102
  %1255 = vmatpush1.bf16.msra.mxu0 %v1101
  %1256 = vmatprep.subr.bf16.mxu0 %v1109
  %1257 = vmatpush1.bf16.msra.mxu0 %v1108
  %1258 = vmatprep.subr.bf16.mxu0 %v1217
  %1259 = vmatpush1.bf16.msra.mxu0 %v1214
  %1260 = vmatprep.subr.bf16.mxu0 0
  %1261 = vmatpush1.bf16.msra.mxu0 0
  %1262 = vmatprep.subr.bf16.mxu0 0
  %1263 = vmatpush1.bf16.msra.mxu0 0
  %1264 = vmatprep.subr.bf16.mxu0 0
  %1265 = vmatpush1.bf16.msra.mxu0 0
  %1266 = vmatprep.mubr.bf16.mxu0 %v1208
  %1267 = vmatmul.mubr.bf16.gmra.mrb[0].mxu0 %v614
  %v1268 = vpop.f32.mrb[0].mxu0
  %v1269 = vadd.f32 %v724, %v1268
  %v1270 = vpop.f32.mrb[0].mxu0
  %v1271 = vadd.f32 %v728, %v1270
  %v1272 = vpop.f32.mrb[0].mxu0
  %v1273 = vpop.f32.mrb[0].mxu0
  %1274 = vdwg.mxu0
  %1275 = vmatprep.subr.bf16.mxu0 %v1034
  %1276 = vmatpush1.bf16.msra.mxu0 %v1033
  %1277 = vmatprep.subr.bf16.mxu0 %v1041
  %1278 = vmatpush1.bf16.msra.mxu0 %v1040
  %1279 = vmatprep.subr.bf16.mxu0 %v1048
  %1280 = vmatpush1.bf16.msra.mxu0 %v1047
  %1281 = vmatprep.subr.bf16.mxu0 %v1055
  %1282 = vmatpush1.bf16.msra.mxu0 %v1054
  %1283 = vmatprep.subr.bf16.mxu0 %v1062
  %1284 = vmatpush1.bf16.msra.mxu0 %v1061
  %1285 = vmatprep.subr.bf16.mxu0 %v1069
  %1286 = vmatpush1.bf16.msra.mxu0 %v1068
  %1287 = vmatprep.subr.bf16.mxu0 %v1076
  %1288 = vmatpush1.bf16.msra.mxu0 %v1075
  %1289 = vmatprep.subr.bf16.mxu0 %v1083
  %1290 = vmatpush1.bf16.msra.mxu0 %v1082
  %1291 = vmatprep.subr.bf16.mxu0 %v1090
  %1292 = vmatpush1.bf16.msra.mxu0 %v1089
  %1293 = vmatprep.subr.bf16.mxu0 %v1097
  %1294 = vmatpush1.bf16.msra.mxu0 %v1096
  %1295 = vmatprep.subr.bf16.mxu0 %v1104
  %1296 = vmatpush1.bf16.msra.mxu0 %v1103
  %1297 = vmatprep.subr.bf16.mxu0 %v1111
  %1298 = vmatpush1.bf16.msra.mxu0 %v1110
  %1299 = vmatprep.subr.bf16.mxu0 %v1223
  %1300 = vmatpush1.bf16.msra.mxu0 %v1220
  %1301 = vmatprep.subr.bf16.mxu0 0
  %1302 = vmatpush1.bf16.msra.mxu0 0
  %1303 = vmatprep.subr.bf16.mxu0 0
  %1304 = vmatpush1.bf16.msra.mxu0 0
  %1305 = vmatprep.subr.bf16.mxu0 0
  %1306 = vmatpush1.bf16.msra.mxu0 0
  %1307 = vmatprep.mubr.bf16.mxu0 %v1208
  %1308 = vmatmul.mubr.bf16.gmra.mrb[0].mxu0 %v614
  %v1309 = vpop.f32.mrb[0].mxu0
  %v1310 = vadd.f32 %v732, %v1309
  %v1311 = vpop.f32.mrb[0].mxu0
  %v1312 = vadd.f32 %v736, %v1311
  %v1313 = vpop.f32.mrb[0].mxu0
  %v1314 = vpop.f32.mrb[0].mxu0
  %1315 = vdwg.mxu0
  %1316 = vmatprep.subr.bf16.mxu0 %v1036
  %1317 = vmatpush1.bf16.msra.mxu0 %v1035
  %1318 = vmatprep.subr.bf16.mxu0 %v1043
  %1319 = vmatpush1.bf16.msra.mxu0 %v1042
  %1320 = vmatprep.subr.bf16.mxu0 %v1050
  %1321 = vmatpush1.bf16.msra.mxu0 %v1049
  %1322 = vmatprep.subr.bf16.mxu0 %v1057
  %1323 = vmatpush1.bf16.msra.mxu0 %v1056
  %1324 = vmatprep.subr.bf16.mxu0 %v1064
  %1325 = vmatpush1.bf16.msra.mxu0 %v1063
  %1326 = vmatprep.subr.bf16.mxu0 %v1071
  %1327 = vmatpush1.bf16.msra.mxu0 %v1070
  %1328 = vmatprep.subr.bf16.mxu0 %v1078
  %1329 = vmatpush1.bf16.msra.mxu0 %v1077
  %1330 = vmatprep.subr.bf16.mxu0 %v1085
  %1331 = vmatpush1.bf16.msra.mxu0 %v1084
  %1332 = vmatprep.subr.bf16.mxu0 %v1092
  %1333 = vmatpush1.bf16.msra.mxu0 %v1091
  %1334 = vmatprep.subr.bf16.mxu0 %v1099
  %1335 = vmatpush1.bf16.msra.mxu0 %v1098
  %1336 = vmatprep.subr.bf16.mxu0 %v1106
  %1337 = vmatpush1.bf16.msra.mxu0 %v1105
  %1338 = vmatprep.subr.bf16.mxu0 %v1113
  %1339 = vmatpush1.bf16.msra.mxu0 %v1112
  %1340 = vmatprep.subr.bf16.mxu0 %v1229
  %1341 = vmatpush1.bf16.msra.mxu0 %v1226
  %1342 = vmatprep.subr.bf16.mxu0 0
  %1343 = vmatpush1.bf16.msra.mxu0 0
  %1344 = vmatprep.subr.bf16.mxu0 0
  %1345 = vmatpush1.bf16.msra.mxu0 0
  %1346 = vmatprep.subr.bf16.mxu0 0
  %1347 = vmatpush1.bf16.msra.mxu0 0
  %1348 = vmatprep.mubr.bf16.mxu0 %v1208
  %1349 = vmatmul.mubr.bf16.gmra.mrb[0].mxu0 %v614
  %v1350 = vpop.f32.mrb[0].mxu0
  %v1351 = vadd.f32 %v740, %v1350
  %v1352 = vpop.f32.mrb[0].mxu0
  %v1353 = vadd.f32 %v744, %v1352
  %v1354 = vpop.f32.mrb[0].mxu0
  %v1355 = vpop.f32.mrb[0].mxu0
  %1356 = vdwg.mxu0
  %1357 = vmatprep.subr.bf16.mxu0 0
  %1358 = vmatpush1.bf16.msra.mxu0 %v1037
  %1359 = vmatprep.subr.bf16.mxu0 0
  %1360 = vmatpush1.bf16.msra.mxu0 %v1044
  %1361 = vmatprep.subr.bf16.mxu0 0
  %1362 = vmatpush1.bf16.msra.mxu0 %v1051
  %1363 = vmatprep.subr.bf16.mxu0 0
  %1364 = vmatpush1.bf16.msra.mxu0 %v1058
  %1365 = vmatprep.subr.bf16.mxu0 0
  %1366 = vmatpush1.bf16.msra.mxu0 %v1065
  %1367 = vmatprep.subr.bf16.mxu0 0
  %1368 = vmatpush1.bf16.msra.mxu0 %v1072
  %1369 = vmatprep.subr.bf16.mxu0 0
  %1370 = vmatpush1.bf16.msra.mxu0 %v1079
  %1371 = vmatprep.subr.bf16.mxu0 0
  %1372 = vmatpush1.bf16.msra.mxu0 %v1086
  %1373 = vmatprep.subr.bf16.mxu0 0
  %1374 = vmatpush1.bf16.msra.mxu0 %v1093
  %1375 = vmatprep.subr.bf16.mxu0 0
  %1376 = vmatpush1.bf16.msra.mxu0 %v1100
  %1377 = vmatprep.subr.bf16.mxu0 0
  %1378 = vmatpush1.bf16.msra.mxu0 %v1107
  %1379 = vmatprep.subr.bf16.mxu0 0
  %1380 = vmatpush1.bf16.msra.mxu0 %v1114
  %1381 = vmatprep.subr.bf16.mxu0 0
  %1382 = vmatpush1.bf16.msra.mxu0 %v1232
  %1383 = vmatprep.subr.bf16.mxu0 0
  %1384 = vmatpush1.bf16.msra.mxu0 0
  %1385 = vmatprep.subr.bf16.mxu0 0
  %1386 = vmatpush1.bf16.msra.mxu0 0
  %1387 = vmatprep.subr.bf16.mxu0 0
  %1388 = vmatpush1.bf16.msra.mxu0 0
  %1389 = vmatprep.mubr.bf16.mxu0 %v1208
  %1390 = vmatmul.mubr.bf16.gmra.mrb[0].mxu0 %v614
  %v1391 = vpop.f32.mrb[0].mxu0
  %v1392 = vadd.f32 %v748, %v1391
  %v1393 = vpop.f32.mrb[0].mxu0
  %v1394 = vpop.f32.mrb[0].mxu0
  %v1395 = vpop.f32.mrb[0].mxu0
  %1396 = vdwg.mxu0
  %1397 = vst [vmem:[%s6] sm:$0x3f] %v1269
  %1398 = vst [vmem:[%s6 + $0x8] sm:$0x3f] %v1271
  %1399 = vst [vmem:[%s6 + $0x10] sm:$0x3f] %v1310
  %1400 = vst [vmem:[%s6 + $0x18] sm:$0x3f] %v1312
  %1401 = vst [vmem:[%s6 + $0x20] sm:$0x3f] %v1351
  %1402 = vst [vmem:[%s6 + $0x28] sm:$0x3f] %v1353
  %vm1403 = vcmask 78848
  %1404 = vst.msk [vmem:[%s6 + $0x30] sm:$0x3f] %vm1403, %v1392
  // Predicated region
  $region22: #{metro_hand_forward.1} parent=0 // pred_check
    _
  $region23: #{metro_hand_forward.1} parent=0 // pred_check_branch
    %1406 = sbr.rel (0) target = $region25
  $region24: #{metro_hand_forward.1} parent=0 // pred_region
    _
  $region25: #{metro_hand_forward.1} parent=0 // pred_fallthru
    _
  // Predicated region
  $region26: #{metro_hand_forward.1} parent=0 // pred_check
    _
  $region27: #{metro_hand_forward.1} parent=0 // pred_check_branch
    %1408 = sbr.rel (0) target = $region29
  $region28: #{metro_hand_forward.1} parent=0 // pred_region
    _
  $region29: #{metro_hand_forward.1} parent=0 // pred_fallthru
    _
  // Predicated region
  $region30: #{metro_hand_forward.1} parent=0 // pred_check
    _
  $region31: #{metro_hand_forward.1} parent=0 // pred_check_branch
    %1410 = sbr.rel (0) target = $region33
  $region32: #{metro_hand_forward.1} parent=0 // pred_region
    _
  $region33: #{metro_hand_forward.1} parent=0 // pred_fallthru
    _
  // Predicated region
  $region34: #{metro_hand_forward.1} parent=0 // pred_check
    _
  $region35: #{metro_hand_forward.1} parent=0 // pred_check_branch
    %1412 = sbr.rel (0) target = $region37
  $region36: #{metro_hand_forward.1} parent=0 // pred_region
    _
  $region37: #{metro_hand_forward.1} parent=0 // pred_fallthru
    _

</llo_original>
